<compile_context>
chip_gen: v6e
topology: v6e:2x2x1
jax: 0.10.0
libtpu: 0.0.40
codegen_flags: <defaults>
</compile_context>

<pallas_src>
import functools
import math

import jax
import jax.numpy as jnp
from jax.experimental import pallas as pl
from jax.experimental.pallas import tpu as pltpu

PAD = 0
MASK_FILL = -1e9   # finite "-inf": keeps softmax / carried scores NaN-free


# ------------------------------ small helpers -------------------------------

def _row_tile(m, cap=256):
    """Row tile: full if small, else a multiple-of-8 tile."""
    return m if m <= cap else cap


def _col_tile(m, cap=512):
    """Lane tile: full if small, else a multiple-of-128 tile."""
    return m if m <= cap else cap


def _pick_head_block(num_heads, seq_len, budget_bytes=8 << 20):
    """Largest head-group per attention grid step that keeps (GB, L, L) blocks small."""
    gb = 1
    for g in range(1, num_heads + 1):
        if num_heads % g == 0 and g * seq_len * seq_len * 4 * 6 <= budget_bytes:
            gb = g
    return gb


def _parallel(n_axes=1):
    return pltpu.CompilerParams(dimension_semantics=("parallel",) * n_axes)


def _ln(x, g, b, eps):
    mean = jnp.mean(x, axis=-1, keepdims=True)
    var = jnp.mean(jnp.square(x - mean), axis=-1, keepdims=True)
    return (x - mean) * jax.lax.rsqrt(var + eps) * g + b


# ------------------------------ Pallas kernels -------------------------------

def _layernorm_kernel(x_ref, g_ref, b_ref, o_ref, *, eps):
    x = x_ref[...].astype(jnp.float32)
    o_ref[...] = _ln(x, g_ref[...], b_ref[...], eps).astype(o_ref.dtype)


def layernorm_pallas(x, gamma, beta, eps=1e-5):
    M, D = x.shape
    tm = _row_tile(M)
    return pl.pallas_call(
        functools.partial(_layernorm_kernel, eps=eps),
        out_shape=jax.ShapeDtypeStruct((M, D), jnp.float32),
        grid=(pl.cdiv(M, tm),),
        in_specs=[pl.BlockSpec((tm, D), lambda i: (i, 0)),
                  pl.BlockSpec((1, D), lambda i: (0, 0)),
                  pl.BlockSpec((1, D), lambda i: (0, 0))],
        out_specs=pl.BlockSpec((tm, D), lambda i: (i, 0)),
        compiler_params=_parallel(),
    )(x, gamma.reshape(1, D), beta.reshape(1, D))


def _ln_linear_kernel(x_ref, g_ref, b_ref, w_ref, wb_ref, o_ref, *, eps, act):
    xn = _ln(x_ref[...].astype(jnp.float32), g_ref[...], b_ref[...], eps)
    y = jnp.dot(xn.astype(jnp.bfloat16), w_ref[...],
                preferred_element_type=jnp.float32) + wb_ref[...]
    if act == "gelu":
        # TODO(synk): PyTorch F.gelu is erf-based; tanh approximation for Mosaic.
        y = jax.nn.gelu(y, approximate=True)
    o_ref[...] = y.astype(o_ref.dtype)


def ln_linear_pallas(x, gamma, beta, w, wb, act=None, out_dtype=jnp.float32, eps=1e-5):
    """out = act(LayerNorm(x) @ w + wb); row-tiled, bf16 weight resident in VMEM."""
    M, D = x.shape
    N = w.shape[1]
    tm = _row_tile(M)
    return pl.pallas_call(
        functools.partial(_ln_linear_kernel, eps=eps, act=act),
        out_shape=jax.ShapeDtypeStruct((M, N), out_dtype),
        grid=(pl.cdiv(M, tm),),
        in_specs=[pl.BlockSpec((tm, D), lambda i: (i, 0)),
                  pl.BlockSpec((1, D), lambda i: (0, 0)),
                  pl.BlockSpec((1, D), lambda i: (0, 0)),
                  pl.BlockSpec((D, N), lambda i: (0, 0)),
                  pl.BlockSpec((1, N), lambda i: (0, 0))],
        out_specs=pl.BlockSpec((tm, N), lambda i: (i, 0)),
        compiler_params=_parallel(),
    )(x, gamma.reshape(1, D), beta.reshape(1, D), w, wb.reshape(1, N))


def _linear_kernel(x_ref, w_ref, wb_ref, o_ref, *, act):
    y = jnp.dot(x_ref[...].astype(jnp.bfloat16), w_ref[...],
                preferred_element_type=jnp.float32) + wb_ref[...]
    if act == "gelu":
        y = jax.nn.gelu(y, approximate=True)
    o_ref[...] = y.astype(o_ref.dtype)


def linear_pallas(x, w, wb, act=None, out_dtype=jnp.float32):
    M, D = x.shape
    N = w.shape[1]
    tm = _row_tile(M)
    return pl.pallas_call(
        functools.partial(_linear_kernel, act=act),
        out_shape=jax.ShapeDtypeStruct((M, N), out_dtype),
        grid=(pl.cdiv(M, tm),),
        in_specs=[pl.BlockSpec((tm, D), lambda i: (i, 0)),
                  pl.BlockSpec((D, N), lambda i: (0, 0)),
                  pl.BlockSpec((1, N), lambda i: (0, 0))],
        out_specs=pl.BlockSpec((tm, N), lambda i: (i, 0)),
        compiler_params=_parallel(),
    )(x, w, wb.reshape(1, N))


def _linear_residual_kernel(x_ref, w_ref, wb_ref, r_ref, o_ref):
    y = jnp.dot(x_ref[...].astype(jnp.bfloat16), w_ref[...],
                preferred_element_type=jnp.float32) + wb_ref[...]
    o_ref[...] = (r_ref[...].astype(jnp.float32) + y).astype(o_ref.dtype)


def linear_residual_pallas(x, w, wb, residual):
    """out = residual + x @ w + wb (attention output projection + residual add)."""
    M, D = x.shape
    N = w.shape[1]
    tm = _row_tile(M)
    return pl.pallas_call(
        _linear_residual_kernel,
        out_shape=jax.ShapeDtypeStruct((M, N), jnp.float32),
        grid=(pl.cdiv(M, tm),),
        in_specs=[pl.BlockSpec((tm, D), lambda i: (i, 0)),
                  pl.BlockSpec((D, N), lambda i: (0, 0)),
                  pl.BlockSpec((1, N), lambda i: (0, 0)),
                  pl.BlockSpec((tm, N), lambda i: (i, 0))],
        out_specs=pl.BlockSpec((tm, N), lambda i: (i, 0)),
        compiler_params=_parallel(),
    )(x, w, wb.reshape(1, N), residual)


def _ln_ffn_kernel(x_ref, g_ref, b_ref, w1_ref, b1_ref, w2_ref, b2_ref, o_ref, *, eps):
    x = x_ref[...].astype(jnp.float32)
    xn = _ln(x, g_ref[...], b_ref[...], eps)
    h = jnp.dot(xn.astype(jnp.bfloat16), w1_ref[...],
                preferred_element_type=jnp.float32) + b1_ref[...]
    h = jax.nn.gelu(h, approximate=True)
    y = jnp.dot(h.astype(jnp.bfloat16), w2_ref[...],
                preferred_element_type=jnp.float32) + b2_ref[...]
    o_ref[...] = (x + y).astype(o_ref.dtype)


def ln_ffn_pallas(x, gamma, beta, w1, b1, w2, b2, eps=1e-5):
    """out = x + fc2(gelu(fc1(LayerNorm(x)))); the (tm, F) hidden never leaves VMEM."""
    M, D = x.shape
    F = w1.shape[1]
    tm = _row_tile(M)
    return pl.pallas_call(
        functools.partial(_ln_ffn_kernel, eps=eps),
        out_shape=jax.ShapeDtypeStruct((M, D), jnp.float32),
        grid=(pl.cdiv(M, tm),),
        in_specs=[pl.BlockSpec((tm, D), lambda i: (i, 0)),
                  pl.BlockSpec((1, D), lambda i: (0, 0)),
                  pl.BlockSpec((1, D), lambda i: (0, 0)),
                  pl.BlockSpec((D, F), lambda i: (0, 0)),
                  pl.BlockSpec((1, F), lambda i: (0, 0)),
                  pl.BlockSpec((F, D), lambda i: (0, 0)),
                  pl.BlockSpec((1, D), lambda i: (0, 0))],
        out_specs=pl.BlockSpec((tm, D), lambda i: (i, 0)),
        compiler_params=_parallel(),
    )(x, gamma.reshape(1, D), beta.reshape(1, D), w1, b1.reshape(1, F), w2, b2.reshape(1, D))


def _ln_linear_ln_kernel(x_ref, g1_ref, b1_ref, w_ref, wb_ref, g2_ref, b2_ref, o_ref, *, eps):
    xn = _ln(x_ref[...].astype(jnp.float32), g1_ref[...], b1_ref[...], eps)
    y = jnp.dot(xn.astype(jnp.bfloat16), w_ref[...],
                preferred_element_type=jnp.float32) + wb_ref[...]
    y = jax.nn.gelu(y, approximate=True)
    o_ref[...] = _ln(y, g2_ref[...], b2_ref[...], eps).astype(o_ref.dtype)


def ln_linear_ln_pallas(x, g1, b1, w, wb, g2, b2, eps=1e-5):
    """final_ln -> lm_head.dense -> gelu -> lm_head.layer_norm, fused per row-tile."""
    M, D = x.shape
    N = w.shape[1]
    tm = _row_tile(M)
    return pl.pallas_call(
        functools.partial(_ln_linear_ln_kernel, eps=eps),
        out_shape=jax.ShapeDtypeStruct((M, N), jnp.float32),
        grid=(pl.cdiv(M, tm),),
        in_specs=[pl.BlockSpec((tm, D), lambda i: (i, 0)),
                  pl.BlockSpec((1, D), lambda i: (0, 0)),
                  pl.BlockSpec((1, D), lambda i: (0, 0)),
                  pl.BlockSpec((D, N), lambda i: (0, 0)),
                  pl.BlockSpec((1, N), lambda i: (0, 0)),
                  pl.BlockSpec((1, N), lambda i: (0, 0)),
                  pl.BlockSpec((1, N), lambda i: (0, 0))],
        out_specs=pl.BlockSpec((tm, N), lambda i: (i, 0)),
        compiler_params=_parallel(),
    )(x, g1.reshape(1, D), b1.reshape(1, D), w, wb.reshape(1, N),
      g2.reshape(1, N), b2.reshape(1, N))


def _attention_kernel(q_ref, k_ref, v_ref, bias_ref, o_ref, s_ref, *, scale):
    q = q_ref[...][0]                               # (GB, L, Dh) bf16
    k = k_ref[...][0]
    v = v_ref[...][0]
    s = jnp.einsum("gqd,gkd->gqk", q, k, preferred_element_type=jnp.float32)
    s = s * scale + bias_ref[...][:, 0]             # (GB, L, L) f32
    # pre-softmax scores (with bias) become the next layer's attn bias (unicore behaviour)
    s_ref[...] = s[:, None, :, :].astype(s_ref.dtype)
    m = jnp.max(s, axis=-1, keepdims=True)
    p = jnp.exp(s - m)
    p = p * pl.reciprocal(jnp.sum(p, axis=-1, keepdims=True), approx=True)
    o = jnp.einsum("gqk,gkd->gqd", p.astype(v.dtype), v,
                   preferred_element_type=jnp.float32)
    o_ref[...] = o[None].astype(o_ref.dtype)


def attention_pallas(q, k, v, bias, scale):
    """q/k/v: (B, H, L, Dh) bf16; bias/scores: (H, B, L, L) f32.  GB heads per step."""
    # TODO(synk): for very long L a flash-style KV-tiled variant (streamed score
    # output) would be needed to bound VMEM; full (GB, L, L) blocks are used here.
    B, H, L, Dh = q.shape
    GB = _pick_head_block(H, L)
    qkv_spec = pl.BlockSpec((1, GB, L, Dh), lambda b, g: (b, g, 0, 0))
    bias_spec = pl.BlockSpec((GB, 1, L, L), lambda b, g: (g, b, 0, 0))
    return pl.pallas_call(
        functools.partial(_attention_kernel, scale=scale),
        out_shape=(jax.ShapeDtypeStruct((B, H, L, Dh), jnp.bfloat16),
                   jax.ShapeDtypeStruct((H, B, L, L), jnp.float32)),
        grid=(B, H // GB),
        in_specs=[qkv_spec, qkv_spec, qkv_spec, bias_spec],
        out_specs=(pl.BlockSpec((1, GB, L, Dh), lambda b, g: (b, g, 0, 0)),
                   pl.BlockSpec((GB, 1, L, L), lambda b, g: (g, b, 0, 0))),
        compiler_params=_parallel(2),
    )(q, k, v, bias)


def _dist_bias_kernel(d_ref, pm_ref, mean_ref, std_ref, w1_ref, b1_ref,
                      w2_ref, b2_ref, o_ref, *, mul, bias):
    # Fused DistanceEncoder, computed transposed: K on sublanes, the flattened
    # B*L*L pair axis on lanes, so loads/stores of the huge tensor are lane-dense
    # and the RBF / hidden intermediates never touch HBM.
    d = d_ref[...].astype(jnp.float32) * mul + bias                   # (1, T)
    std = jnp.abs(std_ref[...]) + 1e-5                                # (K, 1)
    a = (d - mean_ref[...]) / std                                     # (K, T)
    feat = jnp.exp(-0.5 * a * a) / (math.sqrt(2.0 * math.pi) * std)   # (K, T)
    h = jnp.dot(w1_ref[...], feat.astype(jnp.bfloat16),
                preferred_element_type=jnp.float32) + b1_ref[...]     # (K, T)
    h = jax.nn.gelu(h, approximate=True)
    y = jnp.dot(w2_ref[...], h.astype(jnp.bfloat16),
                preferred_element_type=jnp.float32) + b2_ref[...]     # (H, T)
    y = jnp.where(pm_ref[...] > 0.5, MASK_FILL, y)                    # padded keys
    o_ref[...] = y.astype(o_ref.dtype)


def distance_bias_pallas(d_flat, pad_flat, means, stds, w1t, b1, w2t, b2, *, mul, bias):
    """Fused DistanceEncoder: RBF -> Linear -> GELU -> Linear -> padding fill.
    d_flat / pad_flat: (1, B*L*L); returns (H, B*L*L) attention bias."""
    M = d_flat.shape[1]
    K = means.shape[0]
    H = w2t.shape[0]
    tl = _col_tile(M)
    return pl.pallas_call(
        functools.partial(_dist_bias_kernel, mul=mul, bias=bias),
        out_shape=jax.ShapeDtypeStruct((H, M), jnp.float32),
        grid=(pl.cdiv(M, tl),),
        in_specs=[pl.BlockSpec((1, tl), lambda i: (0, i)),
                  pl.BlockSpec((1, tl), lambda i: (0, i)),
                  pl.BlockSpec((K, 1), lambda i: (0, 0)),
                  pl.BlockSpec((K, 1), lambda i: (0, 0)),
                  pl.BlockSpec((K, K), lambda i: (0, 0)),
                  pl.BlockSpec((K, 1), lambda i: (0, 0)),
                  pl.BlockSpec((H, K), lambda i: (0, 0)),
                  pl.BlockSpec((H, 1), lambda i: (0, 0))],
        out_specs=pl.BlockSpec((H, tl), lambda i: (0, i)),
        compiler_params=_parallel(),
    )(d_flat, pad_flat, means.reshape(K, 1), stds.reshape(K, 1),
      w1t, b1.reshape(K, 1), w2t, b2.reshape(H, 1))


def _mean_pool_kernel(x_ref, o_ref):
    o_ref[...] = jnp.mean(x_ref[...].astype(jnp.float32), axis=1,
                          keepdims=True).astype(o_ref.dtype)


def mean_pool_pallas(x):
    """(B, L, D) -> (B, D) mean over the sequence axis."""
    B, L, D = x.shape
    out = pl.pallas_call(
        _mean_pool_kernel,
        out_shape=jax.ShapeDtypeStruct((B, 1, D), jnp.float32),
        grid=(B,),
        in_specs=[pl.BlockSpec((1, L, D), lambda b: (b, 0, 0))],
        out_specs=pl.BlockSpec((1, 1, D), lambda b: (b, 0, 0)),
        compiler_params=_parallel(),
    )(x)
    return out.reshape(B, D)


# ----------------------------- parameter creation ----------------------------

def init_params(key, cfg):
    D, H, F, V, K, C, NL = (cfg["D"], cfg["H"], cfg["F"], cfg["vocab"],
                            cfg["K"], cfg["C"], cfg["layers"])
    keys = iter(jax.random.split(key, 16 + 8 * NL))

    def nrm(shape, scale=0.02, dtype=jnp.bfloat16):
        return (scale * jax.random.normal(next(keys), shape)).astype(dtype)

    p = {}
    emb = nrm((V, D), dtype=jnp.float32)
    p["embed"] = emb.at[PAD].set(0.0)                 # nn.Embedding(padding_idx=PAD)

    # DistanceEncoder params (Uni-Mol-style Gaussian RBF + NonLinearHead); the two
    # MLP weights are stored transposed for the lane-dense fused kernel.
    p["gauss_mean"] = jnp.linspace(0.0, 3.0, K).astype(jnp.float32)
    p["gauss_std"] = jnp.ones((K,), jnp.float32)
    p["gauss_mul"], p["gauss_bias"] = 1.0, 0.0
    p["de_w1t"], p["de_b1"] = nrm((K, K)), jnp.zeros((K,), jnp.float32)
    p["de_w2t"], p["de_b2"] = nrm((H, K)), jnp.zeros((H,), jnp.float32)

    # TransformerEncoderWithPair
    p["emb_ln_g"], p["emb_ln_b"] = jnp.ones((D,)), jnp.zeros((D,))
    p["final_ln_g"], p["final_ln_b"] = jnp.ones((D,)), jnp.zeros((D,))
    layers = []
    for _ in range(NL):
        layers.append(dict(
            w_qkv=nrm((D, 3 * D)), b_qkv=jnp.zeros((3 * D,), jnp.float32),
            w_o=nrm((D, D)), b_o=jnp.zeros((D,), jnp.float32),
            ln1_g=jnp.ones((D,)), ln1_b=jnp.zeros((D,)),
            ln2_g=jnp.ones((D,)), ln2_b=jnp.zeros((D,)),
            w_fc1=nrm((D, F)), b_fc1=jnp.zeros((F,), jnp.float32),
            w_fc2=nrm((F, D)), b_fc2=jnp.zeros((D,), jnp.float32),
        ))
    p["layers"] = layers

    # MaskLMHead with output_dim = 1195 fold classes
    p["lm_dense_w"], p["lm_dense_b"] = nrm((D, D)), jnp.zeros((D,), jnp.float32)
    p["lm_ln_g"], p["lm_ln_b"] = jnp.ones((D,)), jnp.zeros((D,))
    p["lm_proj_w"], p["lm_proj_b"] = nrm((D, C)), jnp.zeros((C,), jnp.float32)
    return p


# ---------------------------------- forward ----------------------------------

def fold_classification_forward(params, cfg, src_coordinate, src_distance, src_residue):
    B, L = src_residue.shape
    D, H = cfg["D"], cfg["H"]
    Dh = D // H
    padding_mask = (src_residue == PAD)                         # (B, L) bool

    # --- token embedding (gather; plain-JAX glue) ---
    x = params["embed"][src_residue]                            # (B, L, D) f32

    # --- DistanceEncoder -> per-head attention bias (padding fill fused in) ---
    # TODO(synk): exact sable DistanceEncoder source unavailable; approximated with
    # Uni-Mol-style Gaussian RBF + NonLinearHead (src_coordinate enters only via
    # the precomputed src_distance).
    d_flat = src_distance.reshape(1, B * L * L).astype(jnp.float32)
    pad_flat = jnp.broadcast_to(padding_mask[:, None, :], (B, L, L)
                                ).reshape(1, B * L * L).astype(jnp.float32)
    attn_bias = distance_bias_pallas(
        d_flat, pad_flat, params["gauss_mean"], params["gauss_std"],
        params["de_w1t"], params["de_b1"], params["de_w2t"], params["de_b2"],
        mul=params["gauss_mul"], bias=params["gauss_bias"],
    ).reshape(H, B, L, L)                                       # (H, B, L, L) f32

    # --- TransformerEncoderWithPair (pre-LN, eval mode) ---
    x2d = layernorm_pallas(x.reshape(B * L, D), params["emb_ln_g"], params["emb_ln_b"])
    x2d = x2d * (1.0 - padding_mask.reshape(B * L, 1).astype(x2d.dtype))

    scale = Dh ** -0.5
    for lp in params["layers"]:
        # self-attention block: LN+QKV fused, head-blocked attention, out-proj+residual fused
        residual2d = x2d
        qkv = ln_linear_pallas(x2d, lp["ln1_g"], lp["ln1_b"], lp["w_qkv"], lp["b_qkv"],
                               out_dtype=jnp.bfloat16)                 # (B*L, 3D) bf16
        qkv = qkv.reshape(B, L, 3, H, Dh).transpose(2, 0, 3, 1, 4)     # (3, B, H, L, Dh)
        attn_out, scores = attention_pallas(qkv[0], qkv[1], qkv[2], attn_bias, scale)
        attn_bias = scores        # pre-softmax scores feed the next layer as its bias
        attn2d = attn_out.transpose(0, 2, 1, 3).reshape(B * L, D)      # (B*L, D) bf16
        x2d = linear_residual_pallas(attn2d, lp["w_o"], lp["b_o"], residual2d)

        # FFN block: LN + fc1 + gelu + fc2 + residual, one kernel
        x2d = ln_ffn_pallas(x2d, lp["ln2_g"], lp["ln2_b"],
                            lp["w_fc1"], lp["b_fc1"], lp["w_fc2"], lp["b_fc2"])

    # --- MaskLMHead (1195 classes): final_ln + dense + gelu + lm_ln fused; the mean
    # over L commutes with the final linear projection, so pool first, project last.
    h = ln_linear_ln_pallas(x2d, params["final_ln_g"], params["final_ln_b"],
                            params["lm_dense_w"], params["lm_dense_b"],
                            params["lm_ln_g"], params["lm_ln_b"])      # (B*L, D)
    h_mean = mean_pool_pallas(h.reshape(B, L, D))                      # (B, D)
    logits = linear_pallas(h_mean, params["lm_proj_w"], params["lm_proj_b"])  # (B, C)
    return logits


# ------------------------------------ main ------------------------------------

if __name__ == "__main__":
    cfg = dict(B=2, L=8, D=128, H=4, F=256, layers=2, vocab=16, K=128, C=1195)
    key = jax.random.PRNGKey(0)
    k_param, k_res, k_coord = jax.random.split(key, 3)

    params = init_params(k_param, cfg)

    src_residue = jax.random.randint(k_res, (cfg["B"], cfg["L"]), 1, cfg["vocab"])
    src_residue = src_residue.at[:, -2:].set(PAD)               # exercise the padding mask
    src_coordinate = jax.random.normal(k_coord, (cfg["B"], cfg["L"], 3), jnp.float32)
    diff = src_coordinate[:, :, None, :] - src_coordinate[:, None, :, :]
    src_distance = jnp.sqrt(jnp.sum(diff * diff, axis=-1) + 1e-12)

    logits = fold_classification_forward(params, cfg, src_coordinate,
                                         src_distance, src_residue)
    logits = jax.block_until_ready(logits)
    assert logits.shape == (cfg["B"], cfg["C"])
    assert bool(jnp.all(jnp.isfinite(logits)))
    print("KERNEL_OK")
</pallas_src>

<mosaic_0001>
module attributes {stable_mosaic.version = 11 : i64} {
  func.func @_dist_bias_kernel(%arg0: i32, %arg1: memref<1x128xf32, #tpu.memory_space<vmem>>, %arg2: memref<1x128xf32, #tpu.memory_space<vmem>>, %arg3: memref<128x1xf32, #tpu.memory_space<vmem>>, %arg4: memref<128x1xf32, #tpu.memory_space<vmem>>, %arg5: memref<128x128xbf16, #tpu.memory_space<vmem>>, %arg6: memref<128x1xf32, #tpu.memory_space<vmem>>, %arg7: memref<4x128xbf16, #tpu.memory_space<vmem>>, %arg8: memref<4x1xf32, #tpu.memory_space<vmem>>, %arg9: memref<4x128xf32, #tpu.memory_space<vmem>>) attributes {dimension_semantics = [#tpu.dimension_semantics<parallel>], iteration_bounds = array<i64: 1>, scalar_prefetch = 0 : i64, scratch_operands = 0 : i64, tpu.core_type = #tpu.core_type<tc>, window_params = [{transform_indices = @transform_0, window_bounds = array<i64: 1, 128>}, {transform_indices = @transform_1, window_bounds = array<i64: 1, 128>}, {pipeline_mode = #tpu.pipeline_mode<synchronous>, transform_indices = @transform_2, window_bounds = array<i64: 128, 1>}, {pipeline_mode = #tpu.pipeline_mode<synchronous>, transform_indices = @transform_3, window_bounds = array<i64: 128, 1>}, {pipeline_mode = #tpu.pipeline_mode<synchronous>, transform_indices = @transform_4, window_bounds = array<i64: 128, 128>}, {pipeline_mode = #tpu.pipeline_mode<synchronous>, transform_indices = @transform_5, window_bounds = array<i64: 128, 1>}, {pipeline_mode = #tpu.pipeline_mode<synchronous>, transform_indices = @transform_6, window_bounds = array<i64: 4, 128>}, {pipeline_mode = #tpu.pipeline_mode<synchronous>, transform_indices = @transform_7, window_bounds = array<i64: 4, 1>}, {transform_indices = @transform_8, window_bounds = array<i64: 4, 128>}]} {
    %c0 = arith.constant 0 : index
    %c0_0 = arith.constant 0 : index
    %0 = vector.load %arg1[%c0, %c0_0] : memref<1x128xf32, #tpu.memory_space<vmem>>, vector<1x128xf32>
    %cst = arith.constant 1.000000e+00 : f32
    %1 = vector.broadcast %cst : f32 to vector<1x128xf32>
    %2 = arith.mulf %0, %1 : vector<1x128xf32>
    %cst_1 = arith.constant 0.000000e+00 : f32
    %3 = vector.broadcast %cst_1 : f32 to vector<1x128xf32>
    %4 = arith.addf %2, %3 : vector<1x128xf32>
    %c0_2 = arith.constant 0 : index
    %c0_3 = arith.constant 0 : index
    %5 = vector.load %arg4[%c0_2, %c0_3] : memref<128x1xf32, #tpu.memory_space<vmem>>, vector<128x1xf32>
    %6 = math.absf %5 : vector<128x1xf32>
    %cst_4 = arith.constant 9.99999974E-6 : f32
    %7 = vector.broadcast %cst_4 : f32 to vector<128x1xf32>
    %8 = arith.addf %6, %7 : vector<128x1xf32>
    %c0_5 = arith.constant 0 : index
    %c0_6 = arith.constant 0 : index
    %9 = vector.load %arg3[%c0_5, %c0_6] : memref<128x1xf32, #tpu.memory_space<vmem>>, vector<128x1xf32>
    %10 = vector.broadcast %4 : vector<1x128xf32> to vector<128x128xf32>
    %11 = vector.broadcast %9 : vector<128x1xf32> to vector<128x128xf32>
    %12 = arith.subf %10, %11 : vector<128x128xf32>
    %13 = vector.broadcast %8 : vector<128x1xf32> to vector<128x128xf32>
    %14 = arith.divf %12, %13 : vector<128x128xf32>
    %cst_7 = arith.constant -5.000000e-01 : f32
    %15 = vector.broadcast %cst_7 : f32 to vector<128x128xf32>
    %16 = arith.mulf %15, %14 : vector<128x128xf32>
    %17 = arith.mulf %16, %14 : vector<128x128xf32>
    %18 = math.exp %17 : vector<128x128xf32>
    %cst_8 = arith.constant 2.50662827 : f32
    %19 = vector.broadcast %cst_8 : f32 to vector<128x1xf32>
    %20 = arith.mulf %19, %8 : vector<128x1xf32>
    %21 = vector.broadcast %20 : vector<128x1xf32> to vector<128x128xf32>
    %22 = arith.divf %18, %21 : vector<128x128xf32>
    %c0_9 = arith.constant 0 : index
    %c0_10 = arith.constant 0 : index
    %23 = vector.load %arg5[%c0_9, %c0_10] : memref<128x128xbf16, #tpu.memory_space<vmem>>, vector<128x128xbf16>
    %24 = arith.truncf %22 : vector<128x128xf32> to vector<128x128xbf16>
    %cst_11 = arith.constant dense<0.000000e+00> : vector<128x128xf32>
    %25 = tpu.matmul %23, %24, %cst_11 {dimension_numbers = #tpu.dot_dimension_numbers<[1], [0], [0], [1], [0, 0, 1, 1], [], []>} : vector<128x128xbf16>, vector<128x128xbf16>, vector<128x128xf32> -> vector<128x128xf32>
    %c0_12 = arith.constant 0 : index
    %c0_13 = arith.constant 0 : index
    %26 = vector.load %arg6[%c0_12, %c0_13] : memref<128x1xf32, #tpu.memory_space<vmem>>, vector<128x1xf32>
    %27 = vector.broadcast %26 : vector<128x1xf32> to vector<128x128xf32>
    %28 = arith.addf %25, %27 : vector<128x128xf32>
    %29 = arith.mulf %28, %28 : vector<128x128xf32>
    %30 = arith.mulf %28, %29 : vector<128x128xf32>
    %cst_14 = arith.constant 4.471500e-02 : f32
    %31 = vector.broadcast %cst_14 : f32 to vector<128x128xf32>
    %32 = arith.mulf %31, %30 : vector<128x128xf32>
    %33 = arith.addf %28, %32 : vector<128x128xf32>
    %cst_15 = arith.constant 0.797884583 : f32
    %34 = vector.broadcast %cst_15 : f32 to vector<128x128xf32>
    %35 = arith.mulf %34, %33 : vector<128x128xf32>
    %36 = math.tanh %35 : vector<128x128xf32>
    %cst_16 = arith.constant 1.000000e+00 : f32
    %37 = vector.broadcast %cst_16 : f32 to vector<128x128xf32>
    %38 = arith.addf %37, %36 : vector<128x128xf32>
    %cst_17 = arith.constant 5.000000e-01 : f32
    %39 = vector.broadcast %cst_17 : f32 to vector<128x128xf32>
    %40 = arith.mulf %39, %38 : vector<128x128xf32>
    %41 = arith.mulf %28, %40 : vector<128x128xf32>
    %c0_18 = arith.constant 0 : index
    %c0_19 = arith.constant 0 : index
    %42 = vector.load %arg7[%c0_18, %c0_19] : memref<4x128xbf16, #tpu.memory_space<vmem>>, vector<4x128xbf16>
    %43 = arith.truncf %41 : vector<128x128xf32> to vector<128x128xbf16>
    %cst_20 = arith.constant dense<0.000000e+00> : vector<4x128xf32>
    %44 = tpu.matmul %42, %43, %cst_20 {dimension_numbers = #tpu.dot_dimension_numbers<[1], [0], [0], [1], [0, 0, 1, 1], [], []>} : vector<4x128xbf16>, vector<128x128xbf16>, vector<4x128xf32> -> vector<4x128xf32>
    %c0_21 = arith.constant 0 : index
    %c0_22 = arith.constant 0 : index
    %45 = vector.load %arg8[%c0_21, %c0_22] : memref<4x1xf32, #tpu.memory_space<vmem>>, vector<4x1xf32>
    %46 = vector.broadcast %45 : vector<4x1xf32> to vector<4x128xf32>
    %47 = arith.addf %44, %46 : vector<4x128xf32>
    %c0_23 = arith.constant 0 : index
    %c0_24 = arith.constant 0 : index
    %48 = vector.load %arg2[%c0_23, %c0_24] : memref<1x128xf32, #tpu.memory_space<vmem>>, vector<1x128xf32>
    %cst_25 = arith.constant 5.000000e-01 : f32
    %49 = vector.broadcast %cst_25 : f32 to vector<1x128xf32>
    %50 = arith.cmpf ogt, %48, %49 : vector<1x128xf32>
    %cst_26 = arith.constant -1.000000e+09 : f32
    %51 = vector.shape_cast %50 : vector<1x128xi1> to vector<1x128xi1>
    %52 = vector.broadcast %51 : vector<1x128xi1> to vector<4x128xi1>
    %53 = vector.broadcast %cst_26 : f32 to vector<4x128xf32>
    %54 = arith.select %52, %53, %47 : vector<4x128xi1>, vector<4x128xf32>
    %c0_27 = arith.constant 0 : index
    %c0_28 = arith.constant 0 : index
    %55 = vector.load %arg9[%c0_27, %c0_28] : memref<4x128xf32, #tpu.memory_space<vmem>>, vector<4x128xf32>
    tpu.vector_store %arg9[%c0_27, %c0_28], %54 {strides = array<i32>} : memref<4x128xf32, #tpu.memory_space<vmem>>, vector<4x128xf32>,
    return
  }
  func.func @transform_0(%arg0: i32) -> (i32, i32) {
    %c0_i32 = arith.constant 0 : i32
    %c0_i32_0 = arith.constant 0 : i32
    return %c0_i32, %arg0 : i32, i32
  }
  func.func @transform_1(%arg0: i32) -> (i32, i32) {
    %c0_i32 = arith.constant 0 : i32
    %c0_i32_0 = arith.constant 0 : i32
    return %c0_i32, %arg0 : i32, i32
  }
  func.func @transform_2(%arg0: i32) -> (i32, i32) {
    %c0_i32 = arith.constant 0 : i32
    %c0_i32_0 = arith.constant 0 : i32
    %c0_i32_1 = arith.constant 0 : i32
    return %c0_i32, %c0_i32_0 : i32, i32
  }
  func.func @transform_3(%arg0: i32) -> (i32, i32) {
    %c0_i32 = arith.constant 0 : i32
    %c0_i32_0 = arith.constant 0 : i32
    %c0_i32_1 = arith.constant 0 : i32
    return %c0_i32, %c0_i32_0 : i32, i32
  }
  func.func @transform_4(%arg0: i32) -> (i32, i32) {
    %c0_i32 = arith.constant 0 : i32
    %c0_i32_0 = arith.constant 0 : i32
    %c0_i32_1 = arith.constant 0 : i32
    return %c0_i32, %c0_i32_0 : i32, i32
  }
  func.func @transform_5(%arg0: i32) -> (i32, i32) {
    %c0_i32 = arith.constant 0 : i32
    %c0_i32_0 = arith.constant 0 : i32
    %c0_i32_1 = arith.constant 0 : i32
    return %c0_i32, %c0_i32_0 : i32, i32
  }
  func.func @transform_6(%arg0: i32) -> (i32, i32) {
    %c0_i32 = arith.constant 0 : i32
    %c0_i32_0 = arith.constant 0 : i32
    %c0_i32_1 = arith.constant 0 : i32
    return %c0_i32, %c0_i32_0 : i32, i32
  }
  func.func @transform_7(%arg0: i32) -> (i32, i32) {
    %c0_i32 = arith.constant 0 : i32
    %c0_i32_0 = arith.constant 0 : i32
    %c0_i32_1 = arith.constant 0 : i32
    return %c0_i32, %c0_i32_0 : i32, i32
  }
  func.func @transform_8(%arg0: i32) -> (i32, i32) {
    %c0_i32 = arith.constant 0 : i32
    %c0_i32_0 = arith.constant 0 : i32
    return %c0_i32, %arg0 : i32, i32
  }
}

</mosaic_0001>

<llo_original>
// kernel: tpu_custom_call.1
$region0: #{tpu_custom_call.1}
  #allocation0 [shape = 'u32[]', space=smem, size = 0x4, offset = 0x4, fixed_abs, tag = 'smem constant byte address 0x4 - core index']
  #allocation1 [shape = 'u32[144,128]{1,0:T(1,128)}', space=vmem, size = 0x12000, scoped, tag = 'internal scratch']
  %s0 = inlined_call_operand.vmem [shape: f32[1,128], index: 0, kind: input, shape index: {}]
  %s1 = inlined_call_operand.vmem [shape: f32[1,128], index: 1, kind: input, shape index: {}]
  %s2 = inlined_call_operand.vmem [shape: f32[128,1], index: 2, kind: input, shape index: {}]
  %s3 = inlined_call_operand.vmem [shape: f32[128,1], index: 3, kind: input, shape index: {}]
  %s4 = inlined_call_operand.vmem [shape: bf16[128,128], index: 4, kind: input, shape index: {}]
  %s5 = inlined_call_operand.vmem [shape: f32[128,1], index: 5, kind: input, shape index: {}]
  %s6 = inlined_call_operand.vmem [shape: bf16[4,128], index: 6, kind: input, shape index: {}]
  %s7 = inlined_call_operand.vmem [shape: f32[4,1], index: 7, kind: input, shape index: {}]
  %s8 = inlined_call_operand.hbm [shape: f32[4,128], index: 8, kind: output, shape index: {}]
  %s9 = sld [smem:[#allocation0]]
  $region42: #{tpu_custom_call.1} parent=0
    _
  %s11 = ssub.s32 1, %s9
  %s12 = scalar_select 0, %s11, %s9
  $region1: #{tpu_custom_call.1} parent=0
    #allocation2 [shape = 'u8[2048]{0}', space=vmem, size = 0x800, scoped, tag = 'output window, operand 0, single buffered']
    #allocation3 [shape = 's32[1]{0}', space=sflag, size = 0x4, scoped, tag = 'scoped memory for tpu_custom_call.1']
    %13 = vsyncpa [#allocation3], 0
    // Predicated region
    $region2: #{tpu_custom_call.1} parent=1 // pred_check
      _
    $region3: #{tpu_custom_call.1} parent=1 // pred_check_branch
      %15 = sbr.rel (0) target = $region5
    $region4: #{tpu_custom_call.1} parent=1 // pred_region
      _
    $region5: #{tpu_custom_call.1} parent=1 // pred_fallthru
      _
    // Predicated region
    $region6: #{tpu_custom_call.1} parent=1 // pred_check
      _
    $region7: #{tpu_custom_call.1} parent=1 // pred_check_branch
      %17 = sbr.rel (0) target = $region9
    $region8: #{tpu_custom_call.1} parent=1 // pred_region
      _
    $region9: #{tpu_custom_call.1} parent=1 // pred_fallthru
      _
    // Predicated region
    $region10: #{tpu_custom_call.1} parent=1 // pred_check
      _
    $region11: #{tpu_custom_call.1} parent=1 // pred_check_branch
      %19 = sbr.rel (0) target = $region13
    $region12: #{tpu_custom_call.1} parent=1 // pred_region
      _
    $region13: #{tpu_custom_call.1} parent=1 // pred_fallthru
      _
    // Predicated region
    $region14: #{tpu_custom_call.1} parent=1 // pred_check
      _
    $region15: #{tpu_custom_call.1} parent=1 // pred_check_branch
      %21 = sbr.rel (0) target = $region17
    $region16: #{tpu_custom_call.1} parent=1 // pred_region
      _
    $region17: #{tpu_custom_call.1} parent=1 // pred_fallthru
      _
    // Predicated region
    $region18: #{tpu_custom_call.1} parent=1 // pred_check
      _
    $region19: #{tpu_custom_call.1} parent=1 // pred_check_branch
      %23 = sbr.rel (0) target = $region21
    $region20: #{tpu_custom_call.1} parent=1 // pred_region
      _
    $region21: #{tpu_custom_call.1} parent=1 // pred_fallthru
      _
    // Predicated region
    $region22: #{tpu_custom_call.1} parent=1 // pred_check
      _
    $region23: #{tpu_custom_call.1} parent=1 // pred_check_branch
      %25 = sbr.rel (0) target = $region25
    $region24: #{tpu_custom_call.1} parent=1 // pred_region
      _
    $region25: #{tpu_custom_call.1} parent=1 // pred_fallthru
      _
    // Predicated region
    $region26: #{tpu_custom_call.1} parent=1 // pred_check
      _
    $region27: #{tpu_custom_call.1} parent=1 // pred_check_branch
      %27 = sbr.rel (0) target = $region29
    $region28: #{tpu_custom_call.1} parent=1 // pred_region
      _
    $region29: #{tpu_custom_call.1} parent=1 // pred_fallthru
      _
    // Predicated region
    $region30: #{tpu_custom_call.1} parent=1 // pred_check
      _
    $region31: #{tpu_custom_call.1} parent=1 // pred_check_branch
      %29 = sbr.rel (0) target = $region33
    $region32: #{tpu_custom_call.1} parent=1 // pred_region
      _
    $region33: #{tpu_custom_call.1} parent=1 // pred_fallthru
      _
    %v31 = vld [vmem:[%s0] sm:$0x1]
    %v32 = vadd.f32 %v31, 0.0
    %v33 = vld [vmem:[%s3] sm:$0xff]
    %v34 = vld [vmem:[%s3 + $0x8] sm:$0xff]
    %v35 = vld [vmem:[%s3 + $0x10] sm:$0xff]
    %v36 = vld [vmem:[%s3 + $0x18] sm:$0xff]
    %v37 = vld [vmem:[%s3 + $0x20] sm:$0xff]
    %v38 = vld [vmem:[%s3 + $0x28] sm:$0xff]
    %v39 = vld [vmem:[%s3 + $0x30] sm:$0xff]
    %v40 = vld [vmem:[%s3 + $0x38] sm:$0xff]
    %v41 = vld [vmem:[%s3 + $0x40] sm:$0xff]
    %v42 = vld [vmem:[%s3 + $0x48] sm:$0xff]
    %v43 = vld [vmem:[%s3 + $0x50] sm:$0xff]
    %v44 = vld [vmem:[%s3 + $0x58] sm:$0xff]
    %v45 = vld [vmem:[%s3 + $0x60] sm:$0xff]
    %v46 = vld [vmem:[%s3 + $0x68] sm:$0xff]
    %v47 = vld [vmem:[%s3 + $0x70] sm:$0xff]
    %v48 = vld [vmem:[%s3 + $0x78] sm:$0xff]
    %v49 = vand.u32 2147483647, %v33
    %v50 = vand.u32 2147483647, %v34
    %v51 = vand.u32 2147483647, %v35
    %v52 = vand.u32 2147483647, %v36
    %v53 = vand.u32 2147483647, %v37
    %v54 = vand.u32 2147483647, %v38
    %v55 = vand.u32 2147483647, %v39
    %v56 = vand.u32 2147483647, %v40
    %v57 = vand.u32 2147483647, %v41
    %v58 = vand.u32 2147483647, %v42
    %v59 = vand.u32 2147483647, %v43
    %v60 = vand.u32 2147483647, %v44
    %v61 = vand.u32 2147483647, %v45
    %v62 = vand.u32 2147483647, %v46
    %v63 = vand.u32 2147483647, %v47
    %v64 = vand.u32 2147483647, %v48
    %v65 = vadd.f32 %v49, 1e-05
    %v66 = vadd.f32 %v50, 1e-05
    %v67 = vadd.f32 %v51, 1e-05
    %v68 = vadd.f32 %v52, 1e-05
    %v69 = vadd.f32 %v53, 1e-05
    %v70 = vadd.f32 %v54, 1e-05
    %v71 = vadd.f32 %v55, 1e-05
    %v72 = vadd.f32 %v56, 1e-05
    %v73 = vadd.f32 %v57, 1e-05
    %v74 = vadd.f32 %v58, 1e-05
    %v75 = vadd.f32 %v59, 1e-05
    %v76 = vadd.f32 %v60, 1e-05
    %v77 = vadd.f32 %v61, 1e-05
    %v78 = vadd.f32 %v62, 1e-05
    %v79 = vadd.f32 %v63, 1e-05
    %v80 = vadd.f32 %v64, 1e-05
    %v81 = vld [vmem:[%s2] sm:$0xff]
    %v82 = vld [vmem:[%s2 + $0x8] sm:$0xff]
    %v83 = vld [vmem:[%s2 + $0x10] sm:$0xff]
    %v84 = vld [vmem:[%s2 + $0x18] sm:$0xff]
    %v85 = vld [vmem:[%s2 + $0x20] sm:$0xff]
    %v86 = vld [vmem:[%s2 + $0x28] sm:$0xff]
    %v87 = vld [vmem:[%s2 + $0x30] sm:$0xff]
    %v88 = vld [vmem:[%s2 + $0x38] sm:$0xff]
    %v89 = vld [vmem:[%s2 + $0x40] sm:$0xff]
    %v90 = vld [vmem:[%s2 + $0x48] sm:$0xff]
    %v91 = vld [vmem:[%s2 + $0x50] sm:$0xff]
    %v92 = vld [vmem:[%s2 + $0x58] sm:$0xff]
    %v93 = vld [vmem:[%s2 + $0x60] sm:$0xff]
    %v94 = vld [vmem:[%s2 + $0x68] sm:$0xff]
    %v95 = vld [vmem:[%s2 + $0x70] sm:$0xff]
    %v96 = vld [vmem:[%s2 + $0x78] sm:$0xff]
    %v98 = vlaneseq
    %v99 = vshrl.u32 %v98, 7
    %v100 = vsub.s32 0, %v99
    %v101 = vrot.slane %v32, %v100
    %104 = vset.pattern.permute.xlu0 0
    %105 = vperm.xlu0 %104, %v81
    %v106 = vpop.permute.xlu0 %105
    %109 = vset.pattern.permute.xlu0 0
    %110 = vperm.xlu0 %109, %v82
    %v111 = vpop.permute.xlu0 %110
    %114 = vset.pattern.permute.xlu0 0
    %115 = vperm.xlu0 %114, %v83
    %v116 = vpop.permute.xlu0 %115
    %119 = vset.pattern.permute.xlu0 0
    %120 = vperm.xlu0 %119, %v84
    %v121 = vpop.permute.xlu0 %120
    %124 = vset.pattern.permute.xlu0 0
    %125 = vperm.xlu0 %124, %v85
    %v126 = vpop.permute.xlu0 %125
    %129 = vset.pattern.permute.xlu0 0
    %130 = vperm.xlu0 %129, %v86
    %v131 = vpop.permute.xlu0 %130
    %134 = vset.pattern.permute.xlu0 0
    %135 = vperm.xlu0 %134, %v87
    %v136 = vpop.permute.xlu0 %135
    %139 = vset.pattern.permute.xlu0 0
    %140 = vperm.xlu0 %139, %v88
    %v141 = vpop.permute.xlu0 %140
    %144 = vset.pattern.permute.xlu0 0
    %145 = vperm.xlu0 %144, %v89
    %v146 = vpop.permute.xlu0 %145
    %149 = vset.pattern.permute.xlu0 0
    %150 = vperm.xlu0 %149, %v90
    %v151 = vpop.permute.xlu0 %150
    %154 = vset.pattern.permute.xlu0 0
    %155 = vperm.xlu0 %154, %v91
    %v156 = vpop.permute.xlu0 %155
    %159 = vset.pattern.permute.xlu0 0
    %160 = vperm.xlu0 %159, %v92
    %v161 = vpop.permute.xlu0 %160
    %164 = vset.pattern.permute.xlu0 0
    %165 = vperm.xlu0 %164, %v93
    %v166 = vpop.permute.xlu0 %165
    %169 = vset.pattern.permute.xlu0 0
    %170 = vperm.xlu0 %169, %v94
    %v171 = vpop.permute.xlu0 %170
    %174 = vset.pattern.permute.xlu0 0
    %175 = vperm.xlu0 %174, %v95
    %v176 = vpop.permute.xlu0 %175
    %179 = vset.pattern.permute.xlu0 0
    %180 = vperm.xlu0 %179, %v96
    %v181 = vpop.permute.xlu0 %180
    %v183 = vsub.f32 %v101, %v106
    %v184 = vsub.f32 %v101, %v111
    %v185 = vsub.f32 %v101, %v116
    %v186 = vsub.f32 %v101, %v121
    %v187 = vsub.f32 %v101, %v126
    %v188 = vsub.f32 %v101, %v131
    %v189 = vsub.f32 %v101, %v136
    %v190 = vsub.f32 %v101, %v141
    %v191 = vsub.f32 %v101, %v146
    %v192 = vsub.f32 %v101, %v151
    %v193 = vsub.f32 %v101, %v156
    %v194 = vsub.f32 %v101, %v161
    %v195 = vsub.f32 %v101, %v166
    %v196 = vsub.f32 %v101, %v171
    %v197 = vsub.f32 %v101, %v176
    %v198 = vsub.f32 %v101, %v181
    %200 = vset.pattern.permute.xlu0 0
    %201 = vperm.xlu0 %200, %v65
    %v202 = vpop.permute.xlu0 %201
    %205 = vset.pattern.permute.xlu0 0
    %206 = vperm.xlu0 %205, %v66
    %v207 = vpop.permute.xlu0 %206
    %210 = vset.pattern.permute.xlu0 0
    %211 = vperm.xlu0 %210, %v67
    %v212 = vpop.permute.xlu0 %211
    %215 = vset.pattern.permute.xlu0 0
    %216 = vperm.xlu0 %215, %v68
    %v217 = vpop.permute.xlu0 %216
    %220 = vset.pattern.permute.xlu0 0
    %221 = vperm.xlu0 %220, %v69
    %v222 = vpop.permute.xlu0 %221
    %225 = vset.pattern.permute.xlu0 0
    %226 = vperm.xlu0 %225, %v70
    %v227 = vpop.permute.xlu0 %226
    %230 = vset.pattern.permute.xlu0 0
    %231 = vperm.xlu0 %230, %v71
    %v232 = vpop.permute.xlu0 %231
    %235 = vset.pattern.permute.xlu0 0
    %236 = vperm.xlu0 %235, %v72
    %v237 = vpop.permute.xlu0 %236
    %240 = vset.pattern.permute.xlu0 0
    %241 = vperm.xlu0 %240, %v73
    %v242 = vpop.permute.xlu0 %241
    %245 = vset.pattern.permute.xlu0 0
    %246 = vperm.xlu0 %245, %v74
    %v247 = vpop.permute.xlu0 %246
    %250 = vset.pattern.permute.xlu0 0
    %251 = vperm.xlu0 %250, %v75
    %v252 = vpop.permute.xlu0 %251
    %255 = vset.pattern.permute.xlu0 0
    %256 = vperm.xlu0 %255, %v76
    %v257 = vpop.permute.xlu0 %256
    %260 = vset.pattern.permute.xlu0 0
    %261 = vperm.xlu0 %260, %v77
    %v262 = vpop.permute.xlu0 %261
    %265 = vset.pattern.permute.xlu0 0
    %266 = vperm.xlu0 %265, %v78
    %v267 = vpop.permute.xlu0 %266
    %270 = vset.pattern.permute.xlu0 0
    %271 = vperm.xlu0 %270, %v79
    %v272 = vpop.permute.xlu0 %271
    %275 = vset.pattern.permute.xlu0 0
    %276 = vperm.xlu0 %275, %v80
    %v277 = vpop.permute.xlu0 %276
    %v279 = vrcp.pop %v202
    %v280 = vmul.f32 %v183, %v279
    %v281 = vrcp.pop %v207
    %v282 = vmul.f32 %v184, %v281
    %v283 = vrcp.pop %v212
    %v284 = vmul.f32 %v185, %v283
    %v285 = vrcp.pop %v217
    %v286 = vmul.f32 %v186, %v285
    %v287 = vrcp.pop %v222
    %v288 = vmul.f32 %v187, %v287
    %v289 = vrcp.pop %v227
    %v290 = vmul.f32 %v188, %v289
    %v291 = vrcp.pop %v232
    %v292 = vmul.f32 %v189, %v291
    %v293 = vrcp.pop %v237
    %v294 = vmul.f32 %v190, %v293
    %v295 = vrcp.pop %v242
    %v296 = vmul.f32 %v191, %v295
    %v297 = vrcp.pop %v247
    %v298 = vmul.f32 %v192, %v297
    %v299 = vrcp.pop %v252
    %v300 = vmul.f32 %v193, %v299
    %v301 = vrcp.pop %v257
    %v302 = vmul.f32 %v194, %v301
    %v303 = vrcp.pop %v262
    %v304 = vmul.f32 %v195, %v303
    %v305 = vrcp.pop %v267
    %v306 = vmul.f32 %v196, %v305
    %v307 = vrcp.pop %v272
    %v308 = vmul.f32 %v197, %v307
    %v309 = vrcp.pop %v277
    %v310 = vmul.f32 %v198, %v309
    %v311 = vmul.f32 %v280, -0.5
    %v312 = vmul.f32 %v282, -0.5
    %v313 = vmul.f32 %v284, -0.5
    %v314 = vmul.f32 %v286, -0.5
    %v315 = vmul.f32 %v288, -0.5
    %v316 = vmul.f32 %v290, -0.5
    %v317 = vmul.f32 %v292, -0.5
    %v318 = vmul.f32 %v294, -0.5
    %v319 = vmul.f32 %v296, -0.5
    %v320 = vmul.f32 %v298, -0.5
    %v321 = vmul.f32 %v300, -0.5
    %v322 = vmul.f32 %v302, -0.5
    %v323 = vmul.f32 %v304, -0.5
    %v324 = vmul.f32 %v306, -0.5
    %v325 = vmul.f32 %v308, -0.5
    %v326 = vmul.f32 %v310, -0.5
    %v327 = vmul.f32 %v311, %v280
    %v328 = vmul.f32 %v312, %v282
    %v329 = vmul.f32 %v313, %v284
    %v330 = vmul.f32 %v314, %v286
    %v331 = vmul.f32 %v315, %v288
    %v332 = vmul.f32 %v316, %v290
    %v333 = vmul.f32 %v317, %v292
    %v334 = vmul.f32 %v318, %v294
    %v335 = vmul.f32 %v319, %v296
    %v336 = vmul.f32 %v320, %v298
    %v337 = vmul.f32 %v321, %v300
    %v338 = vmul.f32 %v322, %v302
    %v339 = vmul.f32 %v323, %v304
    %v340 = vmul.f32 %v324, %v306
    %v341 = vmul.f32 %v325, %v308
    %v342 = vmul.f32 %v326, %v310
    %v343 = vmul.f32 %v327, 1.442695
    %v344 = vpow.pop %v343
    %v345 = vmul.f32 %v328, 1.442695
    %v346 = vpow.pop %v345
    %v347 = vmul.f32 %v329, 1.442695
    %v348 = vpow.pop %v347
    %v349 = vmul.f32 %v330, 1.442695
    %v350 = vpow.pop %v349
    %v351 = vmul.f32 %v331, 1.442695
    %v352 = vpow.pop %v351
    %v353 = vmul.f32 %v332, 1.442695
    %v354 = vpow.pop %v353
    %v355 = vmul.f32 %v333, 1.442695
    %v356 = vpow.pop %v355
    %v357 = vmul.f32 %v334, 1.442695
    %v358 = vpow.pop %v357
    %v359 = vmul.f32 %v335, 1.442695
    %v360 = vpow.pop %v359
    %v361 = vmul.f32 %v336, 1.442695
    %v362 = vpow.pop %v361
    %v363 = vmul.f32 %v337, 1.442695
    %v364 = vpow.pop %v363
    %v365 = vmul.f32 %v338, 1.442695
    %v366 = vpow.pop %v365
    %v367 = vmul.f32 %v339, 1.442695
    %v368 = vpow.pop %v367
    %v369 = vmul.f32 %v340, 1.442695
    %v370 = vpow.pop %v369
    %v371 = vmul.f32 %v341, 1.442695
    %v372 = vpow.pop %v371
    %v373 = vmul.f32 %v342, 1.442695
    %v374 = vpow.pop %v373
    %v375 = vmul.f32 %v65, 2.5066283
    %v376 = vmul.f32 %v66, 2.5066283
    %v377 = vmul.f32 %v67, 2.5066283
    %v378 = vmul.f32 %v68, 2.5066283
    %v379 = vmul.f32 %v69, 2.5066283
    %v380 = vmul.f32 %v70, 2.5066283
    %v381 = vmul.f32 %v71, 2.5066283
    %v382 = vmul.f32 %v72, 2.5066283
    %v383 = vmul.f32 %v73, 2.5066283
    %v384 = vmul.f32 %v74, 2.5066283
    %v385 = vmul.f32 %v75, 2.5066283
    %v386 = vmul.f32 %v76, 2.5066283
    %v387 = vmul.f32 %v77, 2.5066283
    %v388 = vmul.f32 %v78, 2.5066283
    %v389 = vmul.f32 %v79, 2.5066283
    %v390 = vmul.f32 %v80, 2.5066283
    %392 = vset.pattern.permute.xlu0 0
    %393 = vperm.xlu0 %392, %v375
    %v394 = vpop.permute.xlu0 %393
    %397 = vset.pattern.permute.xlu0 0
    %398 = vperm.xlu0 %397, %v376
    %v399 = vpop.permute.xlu0 %398
    %402 = vset.pattern.permute.xlu0 0
    %403 = vperm.xlu0 %402, %v377
    %v404 = vpop.permute.xlu0 %403
    %407 = vset.pattern.permute.xlu0 0
    %408 = vperm.xlu0 %407, %v378
    %v409 = vpop.permute.xlu0 %408
    %412 = vset.pattern.permute.xlu0 0
    %413 = vperm.xlu0 %412, %v379
    %v414 = vpop.permute.xlu0 %413
    %417 = vset.pattern.permute.xlu0 0
    %418 = vperm.xlu0 %417, %v380
    %v419 = vpop.permute.xlu0 %418
    %422 = vset.pattern.permute.xlu0 0
    %423 = vperm.xlu0 %422, %v381
    %v424 = vpop.permute.xlu0 %423
    %427 = vset.pattern.permute.xlu0 0
    %428 = vperm.xlu0 %427, %v382
    %v429 = vpop.permute.xlu0 %428
    %432 = vset.pattern.permute.xlu0 0
    %433 = vperm.xlu0 %432, %v383
    %v434 = vpop.permute.xlu0 %433
    %437 = vset.pattern.permute.xlu0 0
    %438 = vperm.xlu0 %437, %v384
    %v439 = vpop.permute.xlu0 %438
    %442 = vset.pattern.permute.xlu0 0
    %443 = vperm.xlu0 %442, %v385
    %v444 = vpop.permute.xlu0 %443
    %447 = vset.pattern.permute.xlu0 0
    %448 = vperm.xlu0 %447, %v386
    %v449 = vpop.permute.xlu0 %448
    %452 = vset.pattern.permute.xlu0 0
    %453 = vperm.xlu0 %452, %v387
    %v454 = vpop.permute.xlu0 %453
    %457 = vset.pattern.permute.xlu0 0
    %458 = vperm.xlu0 %457, %v388
    %v459 = vpop.permute.xlu0 %458
    %462 = vset.pattern.permute.xlu0 0
    %463 = vperm.xlu0 %462, %v389
    %v464 = vpop.permute.xlu0 %463
    %467 = vset.pattern.permute.xlu0 0
    %468 = vperm.xlu0 %467, %v390
    %v469 = vpop.permute.xlu0 %468
    %v471 = vrcp.pop %v394
    %v472 = vmul.f32 %v344, %v471
    %v473 = vrcp.pop %v399
    %v474 = vmul.f32 %v346, %v473
    %v475 = vrcp.pop %v404
    %v476 = vmul.f32 %v348, %v475
    %v477 = vrcp.pop %v409
    %v478 = vmul.f32 %v350, %v477
    %v479 = vrcp.pop %v414
    %v480 = vmul.f32 %v352, %v479
    %v481 = vrcp.pop %v419
    %v482 = vmul.f32 %v354, %v481
    %v483 = vrcp.pop %v424
    %v484 = vmul.f32 %v356, %v483
    %v485 = vrcp.pop %v429
    %v486 = vmul.f32 %v358, %v485
    %v487 = vrcp.pop %v434
    %v488 = vmul.f32 %v360, %v487
    %v489 = vrcp.pop %v439
    %v490 = vmul.f32 %v362, %v489
    %v491 = vrcp.pop %v444
    %v492 = vmul.f32 %v364, %v491
    %v493 = vrcp.pop %v449
    %v494 = vmul.f32 %v366, %v493
    %v495 = vrcp.pop %v454
    %v496 = vmul.f32 %v368, %v495
    %v497 = vrcp.pop %v459
    %v498 = vmul.f32 %v370, %v497
    %v499 = vrcp.pop %v464
    %v500 = vmul.f32 %v372, %v499
    %v501 = vrcp.pop %v469
    %v502 = vmul.f32 %v374, %v501
    %v503 = vld [vmem:[%s4] sm:$0xf]
    %v504 = vld [vmem:[%s4 + $0x4] sm:$0xf]
    %v505 = vld [vmem:[%s4 + $0x8] sm:$0xf]
    %v506 = vld [vmem:[%s4 + $0xc] sm:$0xf]
    %v507 = vld [vmem:[%s4 + $0x10] sm:$0xf]
    %v508 = vld [vmem:[%s4 + $0x14] sm:$0xf]
    %v509 = vld [vmem:[%s4 + $0x18] sm:$0xf]
    %v510 = vld [vmem:[%s4 + $0x1c] sm:$0xf]
    %v511 = vld [vmem:[%s4 + $0x20] sm:$0xf]
    %v512 = vld [vmem:[%s4 + $0x24] sm:$0xf]
    %v513 = vld [vmem:[%s4 + $0x28] sm:$0xf]
    %v514 = vld [vmem:[%s4 + $0x2c] sm:$0xf]
    %v515 = vld [vmem:[%s4 + $0x30] sm:$0xf]
    %v516 = vld [vmem:[%s4 + $0x34] sm:$0xf]
    %v517 = vld [vmem:[%s4 + $0x38] sm:$0xf]
    %v518 = vld [vmem:[%s4 + $0x3c] sm:$0xf]
    %v519 = vpack.c.bf16 %v474, %v472
    %v520 = vpack.c.bf16 %v478, %v476
    %v521 = vpack.c.bf16 %v482, %v480
    %v522 = vpack.c.bf16 %v486, %v484
    %v523 = vpack.c.bf16 %v490, %v488
    %v524 = vpack.c.bf16 %v494, %v492
    %v525 = vpack.c.bf16 %v498, %v496
    %v526 = vpack.c.bf16 %v502, %v500
    %v527 = vld [vmem:[%s5] sm:$0xff]
    %v528 = vld [vmem:[%s5 + $0x8] sm:$0xff]
    %v529 = vld [vmem:[%s5 + $0x10] sm:$0xff]
    %v530 = vld [vmem:[%s5 + $0x18] sm:$0xff]
    %v531 = vld [vmem:[%s5 + $0x20] sm:$0xff]
    %v532 = vld [vmem:[%s5 + $0x28] sm:$0xff]
    %v533 = vld [vmem:[%s5 + $0x30] sm:$0xff]
    %v534 = vld [vmem:[%s5 + $0x38] sm:$0xff]
    %v535 = vld [vmem:[%s5 + $0x40] sm:$0xff]
    %v536 = vld [vmem:[%s5 + $0x48] sm:$0xff]
    %v537 = vld [vmem:[%s5 + $0x50] sm:$0xff]
    %v538 = vld [vmem:[%s5 + $0x58] sm:$0xff]
    %v539 = vld [vmem:[%s5 + $0x60] sm:$0xff]
    %v540 = vld [vmem:[%s5 + $0x68] sm:$0xff]
    %v541 = vld [vmem:[%s5 + $0x70] sm:$0xff]
    %v542 = vld [vmem:[%s5 + $0x78] sm:$0xff]
    %544 = vset.pattern.permute.xlu0 0
    %545 = vperm.xlu0 %544, %v527
    %v546 = vpop.permute.xlu0 %545
    %549 = vset.pattern.permute.xlu0 0
    %550 = vperm.xlu0 %549, %v528
    %v551 = vpop.permute.xlu0 %550
    %554 = vset.pattern.permute.xlu0 0
    %555 = vperm.xlu0 %554, %v529
    %v556 = vpop.permute.xlu0 %555
    %559 = vset.pattern.permute.xlu0 0
    %560 = vperm.xlu0 %559, %v530
    %v561 = vpop.permute.xlu0 %560
    %564 = vset.pattern.permute.xlu0 0
    %565 = vperm.xlu0 %564, %v531
    %v566 = vpop.permute.xlu0 %565
    %569 = vset.pattern.permute.xlu0 0
    %570 = vperm.xlu0 %569, %v532
    %v571 = vpop.permute.xlu0 %570
    %574 = vset.pattern.permute.xlu0 0
    %575 = vperm.xlu0 %574, %v533
    %v576 = vpop.permute.xlu0 %575
    %579 = vset.pattern.permute.xlu0 0
    %580 = vperm.xlu0 %579, %v534
    %v581 = vpop.permute.xlu0 %580
    %584 = vset.pattern.permute.xlu0 0
    %585 = vperm.xlu0 %584, %v535
    %v586 = vpop.permute.xlu0 %585
    %589 = vset.pattern.permute.xlu0 0
    %590 = vperm.xlu0 %589, %v536
    %v591 = vpop.permute.xlu0 %590
    %594 = vset.pattern.permute.xlu0 0
    %595 = vperm.xlu0 %594, %v537
    %v596 = vpop.permute.xlu0 %595
    %599 = vset.pattern.permute.xlu0 0
    %600 = vperm.xlu0 %599, %v538
    %v601 = vpop.permute.xlu0 %600
    %604 = vset.pattern.permute.xlu0 0
    %605 = vperm.xlu0 %604, %v539
    %v606 = vpop.permute.xlu0 %605
    %609 = vset.pattern.permute.xlu0 0
    %610 = vperm.xlu0 %609, %v540
    %v611 = vpop.permute.xlu0 %610
    %614 = vset.pattern.permute.xlu0 0
    %615 = vperm.xlu0 %614, %v541
    %v616 = vpop.permute.xlu0 %615
    %619 = vset.pattern.permute.xlu0 0
    %620 = vperm.xlu0 %619, %v542
    %v621 = vpop.permute.xlu0 %620
    %v639 = vunpack.c.l.b16 %v503
    %v640 = vunpack.c.l.b16 %v504
    %v641 = vunpack.c.l.b16 %v505
    %v642 = vunpack.c.l.b16 %v506
    %v643 = vunpack.c.l.b16 %v507
    %v644 = vunpack.c.l.b16 %v508
    %v645 = vunpack.c.l.b16 %v509
    %v646 = vunpack.c.l.b16 %v510
    %v647 = vunpack.c.l.b16 %v511
    %v648 = vunpack.c.l.b16 %v512
    %v649 = vunpack.c.l.b16 %v513
    %v650 = vunpack.c.l.b16 %v514
    %v651 = vunpack.c.l.b16 %v515
    %v652 = vunpack.c.l.b16 %v516
    %v653 = vunpack.c.l.b16 %v517
    %v654 = vunpack.c.l.b16 %v518
    %v655 = vpack.c.b16 %v640, %v639
    %v656 = vpack.c.b16 %v642, %v641
    %v657 = vpack.c.b16 %v644, %v643
    %v658 = vpack.c.b16 %v646, %v645
    %v659 = vpack.c.b16 %v648, %v647
    %v660 = vpack.c.b16 %v650, %v649
    %v661 = vpack.c.b16 %v652, %v651
    %v662 = vpack.c.b16 %v654, %v653
    %671 = vmatprep.subr.bf16.mxu0 0
    %672 = vmatpush1.bf16.msra.mxu0 %v526
    %673 = vmatprep.subr.bf16.mxu0 0
    %674 = vmatpush1.bf16.msra.mxu0 %v525
    %675 = vmatprep.subr.bf16.mxu0 0
    %676 = vmatpush1.bf16.msra.mxu0 %v524
    %677 = vmatprep.subr.bf16.mxu0 0
    %678 = vmatpush1.bf16.msra.mxu0 %v523
    %679 = vmatprep.subr.bf16.mxu0 0
    %680 = vmatpush1.bf16.msra.mxu0 %v522
    %681 = vmatprep.subr.bf16.mxu0 0
    %682 = vmatpush1.bf16.msra.mxu0 %v521
    %683 = vmatprep.subr.bf16.mxu0 0
    %684 = vmatpush1.bf16.msra.mxu0 %v520
    %685 = vmatprep.subr.bf16.mxu0 0
    %686 = vmatpush1.bf16.msra.mxu0 %v519
    %687 = vmatprep.subr.bf16.mxu0 0
    %688 = vmatpush2.bf16.msra.mxu0 0
    %689 = vmatprep.subr.bf16.mxu0 0
    %690 = vmatpush2.bf16.msra.mxu0 0
    %691 = vmatprep.subr.bf16.mxu0 0
    %692 = vmatpush2.bf16.msra.mxu0 0
    %693 = vmatprep.subr.bf16.mxu0 0
    %694 = vmatpush2.bf16.msra.mxu0 0
    %695 = vmatprep.subr.bf16.mxu0 0
    %696 = vmatpush2.bf16.msra.mxu0 0
    %697 = vmatprep.subr.bf16.mxu0 0
    %698 = vmatpush2.bf16.msra.mxu0 0
    %699 = vmatprep.subr.bf16.mxu0 0
    %700 = vmatpush2.bf16.msra.mxu0 0
    %701 = vmatprep.subr.bf16.mxu0 0
    %702 = vmatpush2.bf16.msra.mxu0 0
    %703 = vmatprep.mubr.bf16.mxu0 0
    %704 = vmatmul.mubr.bf16.gmra.mxu0 %v655
    %v705 = vpop.f32.mrf.mxu0
    %v706 = vadd.f32 %v546, %v705
    %v707 = vpop.f32.mrf.mxu0
    %v708 = vpop.f32.mrf.mxu0
    %v709 = vadd.f32 %v551, %v708
    %v710 = vpop.f32.mrf.mxu0
    %711 = vmatprep.mubr.bf16.mxu0 0
    %712 = vmatmul.mubr.bf16.gmra.mxu0 %v656
    %v713 = vpop.f32.mrf.mxu0
    %v714 = vadd.f32 %v556, %v713
    %v715 = vpop.f32.mrf.mxu0
    %v716 = vpop.f32.mrf.mxu0
    %v717 = vadd.f32 %v561, %v716
    %v718 = vpop.f32.mrf.mxu0
    %719 = vmatprep.mubr.bf16.mxu0 0
    %720 = vmatmul.mubr.bf16.gmra.mxu0 %v657
    %v721 = vpop.f32.mrf.mxu0
    %v722 = vadd.f32 %v566, %v721
    %v723 = vpop.f32.mrf.mxu0
    %v724 = vpop.f32.mrf.mxu0
    %v725 = vadd.f32 %v571, %v724
    %v726 = vpop.f32.mrf.mxu0
    %727 = vmatprep.mubr.bf16.mxu0 0
    %728 = vmatmul.mubr.bf16.gmra.mxu0 %v658
    %v729 = vpop.f32.mrf.mxu0
    %v730 = vadd.f32 %v576, %v729
    %v731 = vpop.f32.mrf.mxu0
    %v732 = vpop.f32.mrf.mxu0
    %v733 = vadd.f32 %v581, %v732
    %v734 = vpop.f32.mrf.mxu0
    %735 = vmatprep.mubr.bf16.mxu0 0
    %736 = vmatmul.mubr.bf16.gmra.mxu0 %v659
    %v737 = vpop.f32.mrf.mxu0
    %v738 = vadd.f32 %v586, %v737
    %v739 = vpop.f32.mrf.mxu0
    %v740 = vpop.f32.mrf.mxu0
    %v741 = vadd.f32 %v591, %v740
    %v742 = vpop.f32.mrf.mxu0
    %743 = vmatprep.mubr.bf16.mxu0 0
    %744 = vmatmul.mubr.bf16.gmra.mxu0 %v660
    %v745 = vpop.f32.mrf.mxu0
    %v746 = vadd.f32 %v596, %v745
    %v747 = vpop.f32.mrf.mxu0
    %v748 = vpop.f32.mrf.mxu0
    %v749 = vadd.f32 %v601, %v748
    %v750 = vpop.f32.mrf.mxu0
    %751 = vmatprep.mubr.bf16.mxu0 0
    %752 = vmatmul.mubr.bf16.gmra.mxu0 %v661
    %v753 = vpop.f32.mrf.mxu0
    %v754 = vadd.f32 %v606, %v753
    %v755 = vpop.f32.mrf.mxu0
    %v756 = vpop.f32.mrf.mxu0
    %v757 = vadd.f32 %v611, %v756
    %v758 = vpop.f32.mrf.mxu0
    %759 = vmatprep.mubr.bf16.mxu0 0
    %760 = vmatmul.mubr.bf16.gmra.mxu0 %v662
    %v761 = vpop.f32.mrf.mxu0
    %v762 = vadd.f32 %v616, %v761
    %v763 = vpop.f32.mrf.mxu0
    %v764 = vpop.f32.mrf.mxu0
    %v765 = vadd.f32 %v621, %v764
    %v766 = vpop.f32.mrf.mxu0
    %767 = vdwg.mxu0
    %v768 = vmul.f32 %v706, %v706
    %v769 = vmul.f32 %v709, %v709
    %v770 = vmul.f32 %v714, %v714
    %v771 = vmul.f32 %v717, %v717
    %v772 = vmul.f32 %v722, %v722
    %v773 = vmul.f32 %v725, %v725
    %v774 = vmul.f32 %v730, %v730
    %v775 = vmul.f32 %v733, %v733
    %v776 = vmul.f32 %v738, %v738
    %v777 = vmul.f32 %v741, %v741
    %v778 = vmul.f32 %v746, %v746
    %v779 = vmul.f32 %v749, %v749
    %v780 = vmul.f32 %v754, %v754
    %v781 = vmul.f32 %v757, %v757
    %v782 = vmul.f32 %v762, %v762
    %v783 = vmul.f32 %v765, %v765
    %v784 = vmul.f32 %v706, %v768
    %v785 = vmul.f32 %v709, %v769
    %v786 = vmul.f32 %v714, %v770
    %v787 = vmul.f32 %v717, %v771
    %v788 = vmul.f32 %v722, %v772
    %v789 = vmul.f32 %v725, %v773
    %v790 = vmul.f32 %v730, %v774
    %v791 = vmul.f32 %v733, %v775
    %v792 = vmul.f32 %v738, %v776
    %v793 = vmul.f32 %v741, %v777
    %v794 = vmul.f32 %v746, %v778
    %v795 = vmul.f32 %v749, %v779
    %v796 = vmul.f32 %v754, %v780
    %v797 = vmul.f32 %v757, %v781
    %v798 = vmul.f32 %v762, %v782
    %v799 = vmul.f32 %v765, %v783
    %v800 = vmul.f32 %v784, 0.044715
    %v801 = vmul.f32 %v785, 0.044715
    %v802 = vmul.f32 %v786, 0.044715
    %v803 = vmul.f32 %v787, 0.044715
    %v804 = vmul.f32 %v788, 0.044715
    %v805 = vmul.f32 %v789, 0.044715
    %v806 = vmul.f32 %v790, 0.044715
    %v807 = vmul.f32 %v791, 0.044715
    %v808 = vmul.f32 %v792, 0.044715
    %v809 = vmul.f32 %v793, 0.044715
    %v810 = vmul.f32 %v794, 0.044715
    %v811 = vmul.f32 %v795, 0.044715
    %v812 = vmul.f32 %v796, 0.044715
    %v813 = vmul.f32 %v797, 0.044715
    %v814 = vmul.f32 %v798, 0.044715
    %v815 = vmul.f32 %v799, 0.044715
    %v816 = vadd.f32 %v706, %v800
    %v817 = vadd.f32 %v709, %v801
    %v818 = vadd.f32 %v714, %v802
    %v819 = vadd.f32 %v717, %v803
    %v820 = vadd.f32 %v722, %v804
    %v821 = vadd.f32 %v725, %v805
    %v822 = vadd.f32 %v730, %v806
    %v823 = vadd.f32 %v733, %v807
    %v824 = vadd.f32 %v738, %v808
    %v825 = vadd.f32 %v741, %v809
    %v826 = vadd.f32 %v746, %v810
    %v827 = vadd.f32 %v749, %v811
    %v828 = vadd.f32 %v754, %v812
    %v829 = vadd.f32 %v757, %v813
    %v830 = vadd.f32 %v762, %v814
    %v831 = vadd.f32 %v765, %v815
    %v832 = vmul.f32 %v816, 0.7978846
    %v833 = vmul.f32 %v817, 0.7978846
    %v834 = vmul.f32 %v818, 0.7978846
    %v835 = vmul.f32 %v819, 0.7978846
    %v836 = vmul.f32 %v820, 0.7978846
    %v837 = vmul.f32 %v821, 0.7978846
    %v838 = vmul.f32 %v822, 0.7978846
    %v839 = vmul.f32 %v823, 0.7978846
    %v840 = vmul.f32 %v824, 0.7978846
    %v841 = vmul.f32 %v825, 0.7978846
    %v842 = vmul.f32 %v826, 0.7978846
    %v843 = vmul.f32 %v827, 0.7978846
    %v844 = vmul.f32 %v828, 0.7978846
    %v845 = vmul.f32 %v829, 0.7978846
    %v846 = vmul.f32 %v830, 0.7978846
    %v847 = vmul.f32 %v831, 0.7978846
    %v848 = vtanh.pop %v832
    %v849 = vtanh.pop %v833
    %v850 = vtanh.pop %v834
    %v851 = vtanh.pop %v835
    %v852 = vtanh.pop %v836
    %v853 = vtanh.pop %v837
    %v854 = vtanh.pop %v838
    %v855 = vtanh.pop %v839
    %v856 = vtanh.pop %v840
    %v857 = vtanh.pop %v841
    %v858 = vtanh.pop %v842
    %v859 = vtanh.pop %v843
    %v860 = vtanh.pop %v844
    %v861 = vtanh.pop %v845
    %v862 = vtanh.pop %v846
    %v863 = vtanh.pop %v847
    %v864 = vadd.f32 %v848, 1.0
    %v865 = vadd.f32 %v849, 1.0
    %v866 = vadd.f32 %v850, 1.0
    %v867 = vadd.f32 %v851, 1.0
    %v868 = vadd.f32 %v852, 1.0
    %v869 = vadd.f32 %v853, 1.0
    %v870 = vadd.f32 %v854, 1.0
    %v871 = vadd.f32 %v855, 1.0
    %v872 = vadd.f32 %v856, 1.0
    %v873 = vadd.f32 %v857, 1.0
    %v874 = vadd.f32 %v858, 1.0
    %v875 = vadd.f32 %v859, 1.0
    %v876 = vadd.f32 %v860, 1.0
    %v877 = vadd.f32 %v861, 1.0
    %v878 = vadd.f32 %v862, 1.0
    %v879 = vadd.f32 %v863, 1.0
    %v880 = vmul.f32 %v864, 0.5
    %v881 = vmul.f32 %v865, 0.5
    %v882 = vmul.f32 %v866, 0.5
    %v883 = vmul.f32 %v867, 0.5
    %v884 = vmul.f32 %v868, 0.5
    %v885 = vmul.f32 %v869, 0.5
    %v886 = vmul.f32 %v870, 0.5
    %v887 = vmul.f32 %v871, 0.5
    %v888 = vmul.f32 %v872, 0.5
    %v889 = vmul.f32 %v873, 0.5
    %v890 = vmul.f32 %v874, 0.5
    %v891 = vmul.f32 %v875, 0.5
    %v892 = vmul.f32 %v876, 0.5
    %v893 = vmul.f32 %v877, 0.5
    %v894 = vmul.f32 %v878, 0.5
    %v895 = vmul.f32 %v879, 0.5
    %v896 = vmul.f32 %v706, %v880
    %v897 = vmul.f32 %v709, %v881
    %v898 = vmul.f32 %v714, %v882
    %v899 = vmul.f32 %v717, %v883
    %v900 = vmul.f32 %v722, %v884
    %v901 = vmul.f32 %v725, %v885
    %v902 = vmul.f32 %v730, %v886
    %v903 = vmul.f32 %v733, %v887
    %v904 = vmul.f32 %v738, %v888
    %v905 = vmul.f32 %v741, %v889
    %v906 = vmul.f32 %v746, %v890
    %v907 = vmul.f32 %v749, %v891
    %v908 = vmul.f32 %v754, %v892
    %v909 = vmul.f32 %v757, %v893
    %v910 = vmul.f32 %v762, %v894
    %v911 = vmul.f32 %v765, %v895
    %v912 = vld [vmem:[%s6] sm:$0x3]
    %v913 = vpack.c.bf16 %v897, %v896
    %v914 = vpack.c.bf16 %v899, %v898
    %v915 = vpack.c.bf16 %v901, %v900
    %v916 = vpack.c.bf16 %v903, %v902
    %v917 = vpack.c.bf16 %v905, %v904
    %v918 = vpack.c.bf16 %v907, %v906
    %v919 = vpack.c.bf16 %v909, %v908
    %v920 = vpack.c.bf16 %v911, %v910
    %v921 = vld [vmem:[%s7] sm:$0xf]
    %923 = vset.pattern.permute.xlu0 0
    %924 = vperm.xlu0 %923, %v921
    %v925 = vpop.permute.xlu0 %924
    %927 = vmatprep.subr.bf16.mxu0 0
    %928 = vmatpush1.bf16.msra.mxu0 %v920
    %929 = vmatprep.subr.bf16.mxu0 0
    %930 = vmatpush1.bf16.msra.mxu0 %v919
    %931 = vmatprep.subr.bf16.mxu0 0
    %932 = vmatpush1.bf16.msra.mxu0 %v918
    %933 = vmatprep.subr.bf16.mxu0 0
    %934 = vmatpush1.bf16.msra.mxu0 %v917
    %935 = vmatprep.subr.bf16.mxu0 0
    %936 = vmatpush1.bf16.msra.mxu0 %v916
    %937 = vmatprep.subr.bf16.mxu0 0
    %938 = vmatpush1.bf16.msra.mxu0 %v915
    %939 = vmatprep.subr.bf16.mxu0 0
    %940 = vmatpush1.bf16.msra.mxu0 %v914
    %941 = vmatprep.subr.bf16.mxu0 0
    %942 = vmatpush1.bf16.msra.mxu0 %v913
    %943 = vmatprep.subr.bf16.mxu0 0
    %944 = vmatpush2.bf16.msra.mxu0 0
    %945 = vmatprep.subr.bf16.mxu0 0
    %946 = vmatpush2.bf16.msra.mxu0 0
    %947 = vmatprep.subr.bf16.mxu0 0
    %948 = vmatpush2.bf16.msra.mxu0 0
    %949 = vmatprep.subr.bf16.mxu0 0
    %950 = vmatpush2.bf16.msra.mxu0 0
    %951 = vmatprep.subr.bf16.mxu0 0
    %952 = vmatpush2.bf16.msra.mxu0 0
    %953 = vmatprep.subr.bf16.mxu0 0
    %954 = vmatpush2.bf16.msra.mxu0 0
    %955 = vmatprep.subr.bf16.mxu0 0
    %956 = vmatpush2.bf16.msra.mxu0 0
    %957 = vmatprep.subr.bf16.mxu0 0
    %958 = vmatpush2.bf16.msra.mxu0 0
    %959 = vmatprep.mubr.bf16.mxu0 0
    %960 = vmatmul.mubr.bf16.gmra.mxu0 %v912
    %v961 = vpop.f32.mrf.mxu0
    %v962 = vadd.f32 %v925, %v961
    %v963 = vpop.f32.mrf.mxu0
    %v964 = vpop.f32.mrf.mxu0
    %v965 = vpop.f32.mrf.mxu0
    %966 = vdwg.mxu0
    %v967 = vld [vmem:[%s1] sm:$0x1]
    %vm968 = vcmp.gt.f32.partialorder %v967, 0.5
    %v969 = vsel %vm968, 1, 0
    %v970 = vlaneseq
    %v971 = vshrl.u32 %v970, 7
    %v972 = vsub.s32 0, %v971
    %v973 = vrot.slane %v969, %v972
    %vm974 = vcmp.eq.s32.totalorder %v973, 1
    %v975 = vsel %vm974, -1e+09, %v962
    %976 = vst [vmem:[#allocation2] sm:$0xf] %v975
    // Predicated region
    $region34: #{tpu_custom_call.1} parent=1 // pred_check
      _
    $region35: #{tpu_custom_call.1} parent=1 // pred_check_branch
      %978 = sbr.rel (0) target = $region37
    $region36: #{tpu_custom_call.1} parent=1 // pred_region
      %s980 = ssub.s32 64, 64
      %981 = vsyncadd [#allocation3], %s980
      %s983 = sshll.u32 [#allocation2], 4
      %s984 = int_to_ptr.vmem [resolvable:$true] %s983
      %986 = dma.vmem_to_hbm [thread:$0]  %s984, 64, %s8, [#allocation3]
    $region37: #{tpu_custom_call.1} parent=1 // pred_fallthru
      _
    // Predicated region
    $region38: #{tpu_custom_call.1} parent=1 // pred_check
      _
    $region39: #{tpu_custom_call.1} parent=1 // pred_check_branch
      %988 = sbr.rel (0) target = $region41
    $region40: #{tpu_custom_call.1} parent=1 // pred_region
      %989 = dma.done [#allocation3], 64
    $region41: #{tpu_custom_call.1} parent=1 // pred_fallthru
      _
    %990 = vsyncpa [#allocation3], 1

</llo_original>
